<compile_context>
chip_gen: v7x
topology: tpu7x:2x2x1
jax: 0.10.0
libtpu: 0.0.40
codegen_flags: <defaults>
</compile_context>

<pallas_src>
import functools

import jax
import jax.numpy as jnp
from jax import lax
from jax.experimental import pallas as pl
from jax.experimental.pallas import tpu as pltpu


def _mgcn_kernel(x_ref, xh_ref, w_ref, aff_ref, o_ref, *, cop, k_taps):
    """One (C_out, tl) output tile for one batch element.

    x_ref:   (C_in, TL)        raw input tile (lanes = time)
    xh_ref:  (C_in, 128)       first 128 columns of the NEXT tile (halo)
    w_ref:   (K, 2*cop, C_in)  stacked conv/mask weights per tap (resident)
    aff_ref: (2, 2*cop, 128)   [0]=per-row scale, [1]=per-row shift (resident)
    o_ref:   (C_out, TO)       gated output tile (TO <= TL)
    """
    x = x_ref[...]                                       # (C_in, TL) f32
    tl = x.shape[-1]

    # tap 0: out[:, t] += W[0] @ x[:, t]
    y = jnp.dot(w_ref[0], x, preferred_element_type=jnp.float32)   # (2*cop, TL)

    if k_taps > 1:
        halo = xh_ref[...]                               # (C_in, 128)
        lane = lax.broadcasted_iota(jnp.int32, x.shape, 1)
        for k in range(1, k_taps):
            # x_k[:, t] = x[:, t + k]; the last k lanes come from the next tile.
            xk = pltpu.roll(x, shift=tl - k, axis=1)     # == jnp.roll(x, -k, axis=1)
            for m in range(k):
                xk = jnp.where(lane == tl - k + m, halo[:, m : m + 1], xk)
            y = y + jnp.dot(w_ref[k], xk, preferred_element_type=jnp.float32)

    # Fused per-channel affine epilogue:
    #   rows [0, cop)     : conv rows -> * 1        + b1
    #   rows [cop, 2*cop) : mask rows -> * bn_scale + bn_shift   (BN + b2 folded)
    aff = aff_ref[...]
    y = y * aff[0, :, 0:1] + aff[1, :, 0:1]

    conv = y[:cop]
    gate = pl.reciprocal(1.0 + jnp.exp(-y[cop:]), approx=True)     # sigmoid
    res = conv * gate                                    # (cop, TL)

    oc, ow = o_ref.shape
    o_ref[...] = res[:oc, :ow].astype(o_ref.dtype)


def _round_up(x, m):
    return ((x + m - 1) // m) * m


@functools.partial(
    jax.jit, static_argnames=("kernel_size", "stride", "padding", "tl_max")
)
def mgcn_forward(fts, params, *, kernel_size=2, stride=1, padding=0, tl_max=2048):
    """fts: (B, C_in, L) float32 -> (B, C_out, L_out) float32."""
    if stride != 1:
        raise NotImplementedError("mgcn_forward: only stride == 1 is supported")

    w1, b1 = params["w1"], params["b1"]            # (C_out, C_in, K), (C_out,)
    w2, b2 = params["w2"], params["b2"]
    gamma, beta = params["gamma"], params["beta"]
    mean, var, eps = params["running_mean"], params["running_var"], params["eps"]

    B, C_in, L = fts.shape
    C_out = w1.shape[0]
    K = kernel_size
    assert 1 <= K <= 128

    x = fts
    if padding:
        x = jnp.pad(x, ((0, 0), (0, 0), (padding, padding)))
        L = L + 2 * padding
    L_out = L - K + 1
    assert L_out >= 1

    # ---- time-tile selection ------------------------------------------------
    nt = pl.cdiv(L_out, tl_max)
    if B == 1 and nt == 1 and L_out > 128:
        nt = 2                                  # keep both v7x TensorCores busy
    tl = _round_up(pl.cdiv(L_out, nt), 128)     # lane-dense, balanced tail

    # VMEM budget: double-buffered x + out tiles (f32) must fit every
    # generation's scoped limit (v5e default 16 MiB, v7x physical 64 MiB).
    per_lane = 4 * 2 * (_round_up(C_in, 8) + _round_up(C_out, 8))
    tl_cap = max(128, (20 * 1024 * 1024 // per_lane) // 128 * 128)
    tl = min(tl, tl_cap)
    num_t = pl.cdiv(L_out, tl)

    # Only copy/pad the input when a single tile is wider than L (tiny inputs);
    # long inputs are consumed in place (boundary blocks are handled by Pallas).
    if tl > L:
        x = jnp.pad(x, ((0, 0), (0, 0), (0, tl - L)))
    Lx = x.shape[-1]
    n_hb = pl.cdiv(Lx, 128)                     # 128-lane halo blocks in x
    q = tl // 128

    # Output lane-block: lane-dense tl when it fits, exact L_out otherwise.
    tl_o = tl if tl <= L_out else L_out

    # ---- tiny resident operands (weights / folded-BN affine) -----------------
    Cop = _round_up(C_out, 8)
    two_cop = 2 * Cop
    w_all = jnp.zeros((K, two_cop, C_in), jnp.float32)
    w_all = w_all.at[:, :C_out, :].set(jnp.transpose(w1, (2, 0, 1)).astype(jnp.float32))
    w_all = w_all.at[:, Cop : Cop + C_out, :].set(
        jnp.transpose(w2, (2, 0, 1)).astype(jnp.float32)
    )

    bn_scale = gamma / jnp.sqrt(var + eps)                 # (C_out,)
    bn_shift = beta + bn_scale * (b2 - mean)               # (C_out,)
    aff = jnp.zeros((2, two_cop, 128), jnp.float32)
    aff = aff.at[0, :C_out, 0].set(1.0)                    # conv rows: scale 1
    aff = aff.at[1, :C_out, 0].set(b1)                     # conv rows: + bias
    aff = aff.at[0, Cop : Cop + C_out, 0].set(bn_scale)    # mask rows: BN scale
    aff = aff.at[1, Cop : Cop + C_out, 0].set(bn_shift)    # mask rows: BN shift

    def halo_map(b, j):
        # 128-lane block starting at the first column of the NEXT time tile;
        # clamped when past the end (only feeds masked / discarded lanes then).
        return (b, 0, jnp.minimum((j + 1) * q, n_hb - 1))

    kernel = functools.partial(_mgcn_kernel, cop=Cop, k_taps=K)

    out = pl.pallas_call(
        kernel,
        out_shape=jax.ShapeDtypeStruct((B, C_out, L_out), fts.dtype),
        grid_spec=pltpu.PrefetchScalarGridSpec(
            num_scalar_prefetch=0,
            grid=(B, num_t),
            in_specs=[
                pl.BlockSpec((None, C_in, tl), lambda b, j: (b, 0, j)),     # x tile
                pl.BlockSpec((None, C_in, 128), halo_map),                  # halo view
                pl.BlockSpec((K, two_cop, C_in), lambda b, j: (0, 0, 0)),   # weights
                pl.BlockSpec((2, two_cop, 128), lambda b, j: (0, 0, 0)),    # affine
            ],
            out_specs=pl.BlockSpec((None, C_out, tl_o), lambda b, j: (b, 0, j)),
        ),
        compiler_params=pltpu.CompilerParams(
            dimension_semantics=("parallel", "parallel"),
            vmem_limit_bytes=32 * 1024 * 1024,
        ),
    )(x, x, w_all, aff)
    return out


def _reference(fts, params, *, kernel_size, stride, padding):
    """Independent plain-JAX reference of the same forward math."""
    dn = ("NCH", "OIH", "NCH")
    conv = lax.conv_general_dilated(
        fts, params["w1"], window_strides=(stride,),
        padding=[(padding, padding)], dimension_numbers=dn,
    ) + params["b1"][None, :, None]
    mask = lax.conv_general_dilated(
        fts, params["w2"], window_strides=(stride,),
        padding=[(padding, padding)], dimension_numbers=dn,
    ) + params["b2"][None, :, None]
    inv = params["gamma"] / jnp.sqrt(params["running_var"] + params["eps"])
    bn = (mask - params["running_mean"][None, :, None]) * inv[None, :, None] \
         + params["beta"][None, :, None]
    return conv * (1.0 / (1.0 + jnp.exp(-bn)))


if __name__ == "__main__":
    def make_params(key, c_in, c_out, k):
        ks = jax.random.split(key, 8)
        fan_in = c_in * k
        wb = float(jnp.sqrt(6.0 / fan_in))      # kaiming_uniform_(fan_in, relu)
        bb = float(1.0 / jnp.sqrt(fan_in))      # nn.Conv1d default bias init
        return {
            "w1": jax.random.uniform(ks[0], (c_out, c_in, k), jnp.float32, -wb, wb),
            "b1": jax.random.uniform(ks[1], (c_out,), jnp.float32, -bb, bb),
            "w2": jax.random.uniform(ks[2], (c_out, c_in, k), jnp.float32, -wb, wb),
            "b2": jax.random.uniform(ks[3], (c_out,), jnp.float32, -bb, bb),
            "gamma": jax.random.uniform(ks[4], (c_out,), jnp.float32, 0.5, 1.5),
            "beta": 0.1 * jax.random.normal(ks[5], (c_out,), jnp.float32),
            "running_mean": 0.1 * jax.random.normal(ks[6], (c_out,), jnp.float32),
            "running_var": jax.random.uniform(ks[7], (c_out,), jnp.float32, 0.5, 2.0),
            "eps": jnp.float32(1e-5),
        }

    key = jax.random.PRNGKey(0)
    configs = [
        # (B, C_in, C_out, L, kernel_size, stride, padding)
        (2, 4, 8, 16, 2, 1, 0),     # small, single time tile
        (1, 5, 6, 300, 2, 1, 1),    # multi-tile: exercises the halo + masked tail
    ]
    for i, (B, C_in, C_out, L, K, S, P) in enumerate(configs):
        kp, kx = jax.random.split(jax.random.fold_in(key, i))
        params = make_params(kp, C_in, C_out, K)
        fts = jax.random.normal(kx, (B, C_in, L), jnp.float32)

        out = mgcn_forward(fts, params, kernel_size=K, stride=S, padding=P)
        out = jax.block_until_ready(out)

        ref = _reference(fts, params, kernel_size=K, stride=S, padding=P)
        L_out = (L + 2 * P - K) // S + 1
        assert out.shape == (B, C_out, L_out), out.shape
        err = float(jnp.max(jnp.abs(out - ref)))
        assert jnp.allclose(out, ref, atol=2e-2, rtol=2e-2), err

    print("KERNEL_OK")
</pallas_src>

<mosaic_0001>
module attributes {stable_mosaic.version = 11 : i64} {
  func.func @_mgcn_kernel(%arg0: i32, %arg1: i32, %arg2: memref<1x4x128xf32, #tpu.memory_space<vmem>>, %arg3: memref<1x4x128xf32, #tpu.memory_space<vmem>>, %arg4: memref<2x16x4xf32, #tpu.memory_space<vmem>>, %arg5: memref<2x16x128xf32, #tpu.memory_space<vmem>>, %arg6: memref<1x8x15xf32, #tpu.memory_space<vmem>>) attributes {dimension_semantics = [#tpu.dimension_semantics<parallel>, #tpu.dimension_semantics<parallel>], iteration_bounds = array<i64: 2, 1>, scalar_prefetch = 0 : i64, scratch_operands = 0 : i64, tpu.core_type = #tpu.core_type<tc>, window_params = [{transform_indices = @transform_0, window_bounds = array<i64: 1, 4, 128>}, {transform_indices = @transform_1, window_bounds = array<i64: 1, 4, 128>}, {pipeline_mode = #tpu.pipeline_mode<synchronous>, transform_indices = @transform_2, window_bounds = array<i64: 2, 16, 4>}, {pipeline_mode = #tpu.pipeline_mode<synchronous>, transform_indices = @transform_3, window_bounds = array<i64: 2, 16, 128>}, {transform_indices = @transform_4, window_bounds = array<i64: 1, 8, 15>}]} {
    %c0 = arith.constant 0 : index
    %c0_0 = arith.constant 0 : index
    %c0_1 = arith.constant 0 : index
    %0 = vector.load %arg2[%c0, %c0_0, %c0_1] : memref<1x4x128xf32, #tpu.memory_space<vmem>>, vector<1x4x128xf32>
    %1 = vector.shape_cast %0 : vector<1x4x128xf32> to vector<4x128xf32>
    %c0_2 = arith.constant 0 : index
    %c0_3 = arith.constant 0 : index
    %c0_4 = arith.constant 0 : index
    %2 = vector.load %arg4[%c0_2, %c0_3, %c0_4] : memref<2x16x4xf32, #tpu.memory_space<vmem>>, vector<1x16x4xf32>
    %3 = vector.shape_cast %2 : vector<1x16x4xf32> to vector<16x4xf32>
    %cst = arith.constant dense<0.000000e+00> : vector<16x128xf32>
    %4 = tpu.matmul %3, %1, %cst {dimension_numbers = #tpu.dot_dimension_numbers<[1], [0], [0], [1], [0, 0, 1, 1], [], []>} : vector<16x4xf32>, vector<4x128xf32>, vector<16x128xf32> -> vector<16x128xf32>
    %c0_5 = arith.constant 0 : index
    %c0_6 = arith.constant 0 : index
    %c0_7 = arith.constant 0 : index
    %5 = vector.load %arg3[%c0_5, %c0_6, %c0_7] : memref<1x4x128xf32, #tpu.memory_space<vmem>>, vector<1x4x128xf32>
    %6 = vector.shape_cast %5 : vector<1x4x128xf32> to vector<4x128xf32>
    %7 = tpu.iota {dimensions = array<i32: 1>} : vector<4x128xi32>
    %c127_i32 = arith.constant 127 : i32
    %8 = tpu.dynamic_rotate %1 by %c127_i32 dim 1 : vector<4x128xf32>, i32 -> vector<4x128xf32>
    %c127_i32_8 = arith.constant 127 : i32
    %9 = vector.broadcast %c127_i32_8 : i32 to vector<4x128xi32>
    %10 = arith.cmpi eq, %7, %9 : vector<4x128xi32>
    %11 = vector.extract_strided_slice %6 {offsets = [0, 0], sizes = [4, 1], strides = [1, 1]} : vector<4x128xf32> to vector<4x1xf32>
    %12 = vector.shape_cast %11 : vector<4x1xf32> to vector<4x1xf32>
    %13 = vector.broadcast %12 : vector<4x1xf32> to vector<4x128xf32>
    %14 = arith.select %10, %13, %8 : vector<4x128xi1>, vector<4x128xf32>
    %c1 = arith.constant 1 : index
    %c0_9 = arith.constant 0 : index
    %c0_10 = arith.constant 0 : index
    %15 = vector.load %arg4[%c1, %c0_9, %c0_10] : memref<2x16x4xf32, #tpu.memory_space<vmem>>, vector<1x16x4xf32>
    %16 = vector.shape_cast %15 : vector<1x16x4xf32> to vector<16x4xf32>
    %cst_11 = arith.constant dense<0.000000e+00> : vector<16x128xf32>
    %17 = tpu.matmul %16, %14, %cst_11 {dimension_numbers = #tpu.dot_dimension_numbers<[1], [0], [0], [1], [0, 0, 1, 1], [], []>} : vector<16x4xf32>, vector<4x128xf32>, vector<16x128xf32> -> vector<16x128xf32>
    %18 = arith.addf %4, %17 : vector<16x128xf32>
    %c0_12 = arith.constant 0 : index
    %c0_13 = arith.constant 0 : index
    %c0_14 = arith.constant 0 : index
    %19 = vector.load %arg5[%c0_12, %c0_13, %c0_14] : memref<2x16x128xf32, #tpu.memory_space<vmem>>, vector<2x16x128xf32>
    %20 = vector.extract_strided_slice %19 {offsets = [0, 0, 0], sizes = [1, 16, 1], strides = [1, 1, 1]} : vector<2x16x128xf32> to vector<1x16x1xf32>
    %21 = vector.shape_cast %20 : vector<1x16x1xf32> to vector<16x1xf32>
    %22 = vector.broadcast %21 : vector<16x1xf32> to vector<16x128xf32>
    %23 = arith.mulf %18, %22 : vector<16x128xf32>
    %24 = vector.extract_strided_slice %19 {offsets = [1, 0, 0], sizes = [1, 16, 1], strides = [1, 1, 1]} : vector<2x16x128xf32> to vector<1x16x1xf32>
    %25 = vector.shape_cast %24 : vector<1x16x1xf32> to vector<16x1xf32>
    %26 = vector.broadcast %25 : vector<16x1xf32> to vector<16x128xf32>
    %27 = arith.addf %23, %26 : vector<16x128xf32>
    %28 = vector.extract_strided_slice %27 {offsets = [0, 0], sizes = [8, 128], strides = [1, 1]} : vector<16x128xf32> to vector<8x128xf32>
    %29 = vector.extract_strided_slice %27 {offsets = [8, 0], sizes = [8, 128], strides = [1, 1]} : vector<16x128xf32> to vector<8x128xf32>
    %cst_15 = arith.constant 0.000000e+00 : f32
    %30 = vector.broadcast %cst_15 : f32 to vector<8x128xf32>
    %31 = arith.subf %30, %29 : vector<8x128xf32>
    %32 = math.exp %31 : vector<8x128xf32>
    %cst_16 = arith.constant 1.000000e+00 : f32
    %33 = vector.broadcast %cst_16 : f32 to vector<8x128xf32>
    %34 = arith.addf %33, %32 : vector<8x128xf32>
    %35 = tpu.reciprocal %34 {approx = true} : vector<8x128xf32> -> vector<8x128xf32>
    %36 = arith.mulf %28, %35 : vector<8x128xf32>
    %37 = vector.extract_strided_slice %36 {offsets = [0, 0], sizes = [8, 15], strides = [1, 1]} : vector<8x128xf32> to vector<8x15xf32>
    %c0_17 = arith.constant 0 : index
    %c0_18 = arith.constant 0 : index
    %c0_19 = arith.constant 0 : index
    %38 = vector.load %arg6[%c0_17, %c0_18, %c0_19] : memref<1x8x15xf32, #tpu.memory_space<vmem>>, vector<1x8x15xf32>
    %39 = vector.shape_cast %38 : vector<1x8x15xf32> to vector<8x15xf32>
    %40 = vector.shape_cast %37 : vector<8x15xf32> to vector<1x8x15xf32>
    tpu.vector_store %arg6[%c0_17, %c0_18, %c0_19], %40 {strides = array<i32>} : memref<1x8x15xf32, #tpu.memory_space<vmem>>, vector<1x8x15xf32>,
    return
  }
  func.func @transform_0(%arg0: i32, %arg1: i32) -> (i32, i32, i32) {
    %c0_i32 = arith.constant 0 : i32
    %c0_i32_0 = arith.constant 0 : i32
    return %arg0, %c0_i32, %arg1 : i32, i32, i32
  }
  func.func @transform_1(%arg0: i32, %arg1: i32) -> (i32, i32, i32) {
    %c1_i32 = arith.constant 1 : i32
    %0 = arith.addi %arg1, %c1_i32 : i32
    %c1_i32_0 = arith.constant 1 : i32
    %1 = arith.muli %0, %c1_i32_0 : i32
    %c0_i32 = arith.constant 0 : i32
    %2 = arith.minsi %1, %c0_i32 : i32
    %c0_i32_1 = arith.constant 0 : i32
    %c0_i32_2 = arith.constant 0 : i32
    return %arg0, %c0_i32_1, %2 : i32, i32, i32
  }
  func.func @transform_2(%arg0: i32, %arg1: i32) -> (i32, i32, i32) {
    %c0_i32 = arith.constant 0 : i32
    %c0_i32_0 = arith.constant 0 : i32
    %c0_i32_1 = arith.constant 0 : i32
    %c0_i32_2 = arith.constant 0 : i32
    return %c0_i32, %c0_i32_0, %c0_i32_1 : i32, i32, i32
  }
  func.func @transform_3(%arg0: i32, %arg1: i32) -> (i32, i32, i32) {
    %c0_i32 = arith.constant 0 : i32
    %c0_i32_0 = arith.constant 0 : i32
    %c0_i32_1 = arith.constant 0 : i32
    %c0_i32_2 = arith.constant 0 : i32
    return %c0_i32, %c0_i32_0, %c0_i32_1 : i32, i32, i32
  }
  func.func @transform_4(%arg0: i32, %arg1: i32) -> (i32, i32, i32) {
    %c0_i32 = arith.constant 0 : i32
    %c0_i32_0 = arith.constant 0 : i32
    return %arg0, %c0_i32, %arg1 : i32, i32, i32
  }
}

</mosaic_0001>

<llo_original>
// kernel: mgcn_forward.1
$region0: #{mgcn_forward.1}
  #allocation0 [shape = 'u32[]', space=smem, size = 0x4, offset = 0x4, fixed_abs, tag = 'smem constant byte address 0x4 - core index']
  #allocation1 [shape = 'u32[144,128]{1,0:T(1,128)}', space=vmem, size = 0x12000, scoped, tag = 'internal scratch']
  %s0 = inlined_call_operand.vmem [shape: f32[2,4,128], index: 0, kind: input, shape index: {}, may-alias: {0,1}]
  %s1 = inlined_call_operand.vmem [shape: f32[2,4,128], index: 1, kind: input, shape index: {}, may-alias: {0,1}]
  %s2 = inlined_call_operand.vmem [shape: f32[2,16,4], index: 2, kind: input, shape index: {}]
  %s3 = inlined_call_operand.vmem [shape: f32[2,16,128], index: 3, kind: input, shape index: {}]
  %s4 = inlined_call_operand.hbm [shape: f32[2,8,15], index: 4, kind: output, shape index: {}]
  %s5 = sld [smem:[#allocation0]]
  $region49: #{mgcn_forward.1} parent=0
    _
  %s7 = ssub.s32 1, %s5
  %s8 = scalar_select 0, %s7, %s5
  $region1: #{mgcn_forward.1} parent=0
    #allocation2 [shape = 'u8[8192]{0}', space=vmem, size = 0x2000, scoped, tag = 'output window, operand 0']
    #allocation3 [shape = 's32[2]{0}', space=sflag, size = 0x8, scoped, tag = 'scoped memory for mgcn_forward.1']
    %9 = vsyncpa [#allocation3], 0
    %s10 = scalar_lea.sflag [#allocation3], 1
    %11 = vsyncpa %s10, 0
    loop: start=0, step=1, limit=4
    $region2: #{mgcn_forward.1} parent=1 // loop_pre_header
      _
    $region3: #{mgcn_forward.1} parent=1 // loop_header
      %s13 = sphi 0, %s17
      %p14 = scmp.ge.s32.totalorder %s13, 4
      %s20 = sphi 0, %s32
      %s21 = sphi 0, %s28
      %s22 = sphi 0, %s20
      %s23 = sphi 0, %s21
      %s24 = sphi 0, %s22
      %s25 = sphi 0, %s23
      %s37 = sphi 0, %s39
      %s40 = sphi 0, %s37
      %s41 = sphi 0, %s40
      %s57 = sphi 0, %s41
      %s71 = sphi 0, %s73
      %s74 = sphi 0, %s71
      %s75 = sphi 0, %s74
      %s91 = sphi 0, %s75
      %s95 = sphi 0, %s95
      %s97 = sphi 0, %s95
      %s98 = sphi 0, %s97
      %s112 = sphi 0, %s98
      %s116 = sphi 0, %s116
      %s118 = sphi 0, %s116
      %s119 = sphi 0, %s118
      %s133 = sphi 0, %s119
      %s141 = sphi 0, %s143
      %s144 = sphi 0, %s141
      %s145 = sphi 0, %s144
      %s161 = sphi 0, %s145
    $region4: #{mgcn_forward.1} parent=1 // loop_header_branch
      %16 = sbr.rel (%p14) target = $region8
    $region5: #{mgcn_forward.1} parent=1 // loop_body
      %s18 = ssub.s32 %s13, 1
      %s19 = ssub.s32 %s13, 2
      %s26 = sadd.s32 1, %s21
      %p27 = scmp.ge.s32.totalorder %s26, 1
      %s28 = scalar_select %p27, 0, %s26
      %s29 = sadd.s32 1, %s20
      %s30 = scalar_select %p27, %s29, %s20
      %p31 = scmp.ge.s32.totalorder %s30, 2
      %s32 = scalar_select %p31, 0, %s30
      %s33 = ssub.s32 %s20, %s32
      %s34 = ssub.s32 %s21, %s28
      %s35 = sor.u32 %s33, %s34
      %p36 = scmp.eq.s32.totalorder %s35, 0
      %s38 = sadd.s32 %s37, 1
      %s39 = scalar_select %p36, %s37, %s38
      %p42 = pneg %p36
      %p43 = scmp.eq.s32.totalorder %s13, 1
      %p44 = por %p42, %p43
      %p45 = scmp.ne.s32.totalorder %s37, %s40
      %p46 = scmp.eq.s32.totalorder %s13, 0
      %p47 = por %p45, %p46
      %p48 = scmp.ne.s32.totalorder %s37, %s40
      %p49 = scmp.eq.s32.totalorder %s18, 1
      %p50 = por %p48, %p49
      %p51 = scmp.ne.s32.totalorder %s40, %s41
      %p52 = scmp.eq.s32.totalorder %s18, 0
      %p53 = por %p51, %p52
      %p54 = scmp.ne.s32.totalorder %s40, %s41
      %p55 = scmp.eq.s32.totalorder %s19, 1
      %p56 = por %p54, %p55
      %p58 = scmp.ne.s32.totalorder %s41, %s57
      %p59 = scmp.eq.s32.totalorder %s19, 0
      %p60 = por %p58, %p59
      %s61 = sadd.s32 %s21, 1
      %p62 = scmp.lt.s32.totalorder %s61, 0
      %s63 = scalar_select %p62, %s61, 0
      %s64 = sadd.s32 %s28, 1
      %p65 = scmp.lt.s32.totalorder %s64, 0
      %s66 = scalar_select %p65, %s64, 0
      %s67 = ssub.s32 %s20, %s32
      %s68 = ssub.s32 %s63, %s66
      %s69 = sor.u32 %s67, %s68
      %p70 = scmp.eq.s32.totalorder %s69, 0
      %s72 = sadd.s32 %s71, 1
      %s73 = scalar_select %p70, %s71, %s72
      %p76 = pneg %p70
      %p77 = scmp.eq.s32.totalorder %s13, 1
      %p78 = por %p76, %p77
      %p79 = scmp.ne.s32.totalorder %s71, %s74
      %p80 = scmp.eq.s32.totalorder %s13, 0
      %p81 = por %p79, %p80
      %p82 = scmp.ne.s32.totalorder %s71, %s74
      %p83 = scmp.eq.s32.totalorder %s18, 1
      %p84 = por %p82, %p83
      %p85 = scmp.ne.s32.totalorder %s74, %s75
      %p86 = scmp.eq.s32.totalorder %s18, 0
      %p87 = por %p85, %p86
      %p88 = scmp.ne.s32.totalorder %s74, %s75
      %p89 = scmp.eq.s32.totalorder %s19, 1
      %p90 = por %p88, %p89
      %p92 = scmp.ne.s32.totalorder %s75, %s91
      %p93 = scmp.eq.s32.totalorder %s19, 0
      %p94 = por %p92, %p93
      %s96 = sadd.s32 %s95, 1
      %p99 = scmp.eq.s32.totalorder %s13, 1
      %p100 = scmp.ne.s32.totalorder %s95, %s97
      %p101 = scmp.eq.s32.totalorder %s13, 0
      %p102 = por %p100, %p101
      %p103 = scmp.ne.s32.totalorder %s95, %s97
      %p104 = scmp.eq.s32.totalorder %s18, 1
      %p105 = por %p103, %p104
      %p106 = scmp.ne.s32.totalorder %s97, %s98
      %p107 = scmp.eq.s32.totalorder %s18, 0
      %p108 = por %p106, %p107
      %p109 = scmp.ne.s32.totalorder %s97, %s98
      %p110 = scmp.eq.s32.totalorder %s19, 1
      %p111 = por %p109, %p110
      %p113 = scmp.ne.s32.totalorder %s98, %s112
      %p114 = scmp.eq.s32.totalorder %s19, 0
      %p115 = por %p113, %p114
      %s117 = sadd.s32 %s116, 1
      %p120 = scmp.eq.s32.totalorder %s13, 1
      %p121 = scmp.ne.s32.totalorder %s116, %s118
      %p122 = scmp.eq.s32.totalorder %s13, 0
      %p123 = por %p121, %p122
      %p124 = scmp.ne.s32.totalorder %s116, %s118
      %p125 = scmp.eq.s32.totalorder %s18, 1
      %p126 = por %p124, %p125
      %p127 = scmp.ne.s32.totalorder %s118, %s119
      %p128 = scmp.eq.s32.totalorder %s18, 0
      %p129 = por %p127, %p128
      %p130 = scmp.ne.s32.totalorder %s118, %s119
      %p131 = scmp.eq.s32.totalorder %s19, 1
      %p132 = por %p130, %p131
      %p134 = scmp.ne.s32.totalorder %s119, %s133
      %p135 = scmp.eq.s32.totalorder %s19, 0
      %p136 = por %p134, %p135
      %s137 = ssub.s32 %s20, %s32
      %s138 = ssub.s32 %s21, %s28
      %s139 = sor.u32 %s137, %s138
      %p140 = scmp.eq.s32.totalorder %s139, 0
      %s142 = sadd.s32 %s141, 1
      %s143 = scalar_select %p140, %s141, %s142
      %p146 = pneg %p140
      %p147 = scmp.eq.s32.totalorder %s13, 1
      %p148 = por %p146, %p147
      %p149 = scmp.ne.s32.totalorder %s141, %s144
      %p150 = scmp.eq.s32.totalorder %s13, 0
      %p151 = por %p149, %p150
      %p152 = scmp.ne.s32.totalorder %s141, %s144
      %p153 = scmp.eq.s32.totalorder %s18, 1
      %p154 = por %p152, %p153
      %p155 = scmp.ne.s32.totalorder %s144, %s145
      %p156 = scmp.eq.s32.totalorder %s18, 0
      %p157 = por %p155, %p156
      %p158 = scmp.ne.s32.totalorder %s144, %s145
      %p159 = scmp.eq.s32.totalorder %s19, 1
      %p160 = por %p158, %p159
      %p162 = scmp.ne.s32.totalorder %s145, %s161
      %p163 = scmp.eq.s32.totalorder %s19, 0
      %p164 = por %p162, %p163
      %p165 = scmp.le.s32.totalorder 1, %s13
      %p166 = scmp.lt.s32.totalorder %s13, 3
      %p167 = pnand %p165, %p166
      %p168 = pneg %p167
      // Predicated region
      $region9: #{mgcn_forward.1} parent=5 // pred_check
        _
      $region10: #{mgcn_forward.1} parent=5 // pred_check_branch
        %170 = sbr.rel (%p167) target = $region12
      $region11: #{mgcn_forward.1} parent=5 // pred_region
        %s171 = ssub.s32 %s13, 1
        // Predicated region
        $region13: #{mgcn_forward.1} parent=11 // pred_check
          %p172 = pneg %p108
        $region14: #{mgcn_forward.1} parent=11 // pred_check_branch
          %174 = sbr.rel (%p172) target = $region16
        $region15: #{mgcn_forward.1} parent=11 // pred_region
          _
        $region16: #{mgcn_forward.1} parent=11 // pred_fallthru
          _
        // Predicated region
        $region17: #{mgcn_forward.1} parent=11 // pred_check
          %p175 = pneg %p129
        $region18: #{mgcn_forward.1} parent=11 // pred_check_branch
          %177 = sbr.rel (%p175) target = $region20
        $region19: #{mgcn_forward.1} parent=11 // pred_region
          _
        $region20: #{mgcn_forward.1} parent=11 // pred_fallthru
          _
      $region12: #{mgcn_forward.1} parent=5 // pred_fallthru
        _
      %p178 = scmp.lt.s32.totalorder %s13, 2
      // Predicated region
      $region21: #{mgcn_forward.1} parent=5 // pred_check
        %p179 = pneg %p178
      $region22: #{mgcn_forward.1} parent=5 // pred_check_branch
        %181 = sbr.rel (%p179) target = $region24
      $region23: #{mgcn_forward.1} parent=5 // pred_region
        // Predicated region
        $region25: #{mgcn_forward.1} parent=23 // pred_check
          %p182 = pneg %p47
        $region26: #{mgcn_forward.1} parent=23 // pred_check_branch
          %184 = sbr.rel (%p182) target = $region28
        $region27: #{mgcn_forward.1} parent=23 // pred_region
          %p185 = scmp.lt.s32.totalorder %s20, 1
          %s186 = scalar_select %p185, %s20, 1
          %p187 = scmp.lt.s32.totalorder %s21, 0
          %s188 = scalar_select %p187, %s21, 0
          %s189 = sadd.s32 %s188, %s186
          %s190 = smul.addr %s189, 4
          %s191 = scalar_lea.vmem %s0, %s190
        $region28: #{mgcn_forward.1} parent=23 // pred_fallthru
          _
        // Predicated region
        $region29: #{mgcn_forward.1} parent=23 // pred_check
          %p192 = pneg %p81
        $region30: #{mgcn_forward.1} parent=23 // pred_check_branch
          %194 = sbr.rel (%p192) target = $region32
        $region31: #{mgcn_forward.1} parent=23 // pred_region
          %s195 = sadd.s32 %s21, 1
          %p196 = scmp.lt.s32.totalorder %s195, 0
          %s197 = scalar_select %p196, %s195, 0
          %p198 = scmp.lt.s32.totalorder %s20, 1
          %s199 = scalar_select %p198, %s20, 1
          %p200 = scmp.lt.s32.totalorder %s197, 0
          %s201 = scalar_select %p200, %s197, 0
          %s202 = sadd.s32 %s201, %s199
          %s203 = smul.addr %s202, 4
          %s204 = scalar_lea.vmem %s1, %s203
          %s205 = sadd.s32 %s21, 1
          %p206 = scmp.lt.s32.totalorder %s205, 0
          %s207 = scalar_select %p206, %s205, 0
        $region32: #{mgcn_forward.1} parent=23 // pred_fallthru
          _
      $region24: #{mgcn_forward.1} parent=5 // pred_fallthru
        _
      %p208 = scmp.le.s32.totalorder 1, %s13
      %p209 = scmp.lt.s32.totalorder %s13, 3
      %p210 = pnand %p208, %p209
      %p211 = pneg %p210
      // Predicated region
      $region33: #{mgcn_forward.1} parent=5 // pred_check
        _
      $region34: #{mgcn_forward.1} parent=5 // pred_check_branch
        %213 = sbr.rel (%p210) target = $region36
      $region35: #{mgcn_forward.1} parent=5 // pred_region
        %s214 = ssub.s32 %s13, 1
        %p215 = scmp.lt.s32.totalorder %s22, 1
        %s216 = scalar_select %p215, %s22, 1
        %p217 = scmp.lt.s32.totalorder %s23, 0
        %s218 = scalar_select %p217, %s23, 0
        %s219 = sadd.s32 %s218, %s216
        %s220 = smul.addr %s219, 4
        %s221 = scalar_lea.vmem %s0, %s220
        %p222 = pneg %p53
        %p223 = pneg %p50
        %s224 = sadd.s32 %s23, 1
        %p225 = scmp.lt.s32.totalorder %s224, 0
        %s226 = scalar_select %p225, %s224, 0
        %p227 = scmp.lt.s32.totalorder %s22, 1
        %s228 = scalar_select %p227, %s22, 1
        %p229 = scmp.lt.s32.totalorder %s226, 0
        %s230 = scalar_select %p229, %s226, 0
        %s231 = sadd.s32 %s230, %s228
        %s232 = smul.addr %s231, 4
        %s233 = scalar_lea.vmem %s1, %s232
        %p234 = pneg %p87
        %p235 = pneg %p84
        %p236 = pneg %p108
        %p237 = pneg %p105
        %p238 = pneg %p129
        %p239 = pneg %p126
        %p240 = pneg %p157
        %p241 = pneg %p154
        %s242 = sand.u32 %s144, 1
        %s243 = scalar_lea.sflag [#allocation3], %s242
        %s244 = sand.u32 %s144, 1
        %s245 = smul.addr %s244, 8
        %s246 = scalar_lea.vmem [#allocation2], %s245
        %p247 = scmp.lt.s32.totalorder %s22, 1
        %s248 = scalar_select %p247, %s22, 1
        %p249 = scmp.lt.s32.totalorder %s23, 0
        %s250 = scalar_select %p249, %s23, 0
        %s251 = sadd.s32 %s250, %s248
        %s252 = smul.addr %s251, 4
        %s253 = scalar_lea.vmem %s0, %s252
        %s254 = sadd.s32 %s23, 1
        %p255 = scmp.lt.s32.totalorder %s254, 0
        %s256 = scalar_select %p255, %s254, 0
        %p257 = scmp.lt.s32.totalorder %s22, 1
        %s258 = scalar_select %p257, %s22, 1
        %p259 = scmp.lt.s32.totalorder %s256, 0
        %s260 = scalar_select %p259, %s256, 0
        %s261 = sadd.s32 %s260, %s258
        %s262 = smul.addr %s261, 4
        %s263 = scalar_lea.vmem %s1, %s262
        %s264 = sadd.s32 %s23, 1
        %p265 = scmp.lt.s32.totalorder %s264, 0
        %s266 = scalar_select %p265, %s264, 0
        %v267 = vld [vmem:[%s253] sm:$0xf]
        %v268 = vld [vmem:[%s2] sm:$0xff]
        %v269 = vld [vmem:[%s2 + $0x8] sm:$0xff]
        %v270 = vld [vmem:[%s263] sm:$0xf]
        %v271 = vlaneseq
        %v272 = vand.u32 %v271, 127
        %273 = vrot.lane.b32.xlu0 %v267, 127
        %v274 = vpop.permute.xlu0 %273
        %vm275 = vcmp.eq.s32.totalorder %v272, 127
        %277 = vset.pattern.permute.xlu0 0
        %278 = vperm.xlu0 %277, %v270
        %v279 = vpop.permute.xlu0 %278
        %v281 = vsel %vm275, %v279, %v274
        %s282 = scalar_lea.vmem %s2, 16
        %v283 = vld [vmem:[%s282] sm:$0xff]
        %v284 = vld [vmem:[%s282 + $0x8] sm:$0xff]
        %vm285 = vcmask 31744
        %v287 = vsel %vm285, %v283, 0
        %v290 = vsel %vm285, %v284, 0
        %vm292 = vcmask 1043456
        %v294 = vsel %vm292, %v281, 0
        %296 = vmatprep.subr.mxu0 0.0
        %297 = vmatpush1.msra.mxu0 %v294
        %298 = vmatprep.subr.mxu0 0.0
        %299 = vmatpush1.msra.mxu0 0.0
        %300 = vmatprep.subr.mxu0 0.0
        %301 = vmatpush1.msra.mxu0 0.0
        %302 = vmatprep.subr.mxu0 0.0
        %303 = vmatpush1.msra.mxu0 0.0
        %304 = vmatprep.subr.mxu0 0.0
        %305 = vmatpush1.msra.mxu0 0.0
        %306 = vmatprep.subr.mxu0 0.0
        %307 = vmatpush1.msra.mxu0 0.0
        %308 = vmatprep.subr.mxu0 0.0
        %309 = vmatpush1.msra.mxu0 0.0
        %310 = vmatprep.subr.mxu0 0.0
        %311 = vmatpush1.msra.mxu0 0.0
        %312 = vmatprep.subr.mxu0 0.0
        %313 = vmatpush1.msra.mxu0 0.0
        %314 = vmatprep.subr.mxu0 0.0
        %315 = vmatpush1.msra.mxu0 0.0
        %316 = vmatprep.subr.mxu0 0.0
        %317 = vmatpush1.msra.mxu0 0.0
        %318 = vmatprep.subr.mxu0 0.0
        %319 = vmatpush1.msra.mxu0 0.0
        %320 = vmatprep.subr.mxu0 0.0
        %321 = vmatpush1.msra.mxu0 0.0
        %322 = vmatprep.subr.mxu0 0.0
        %323 = vmatpush1.msra.mxu0 0.0
        %324 = vmatprep.subr.mxu0 0.0
        %325 = vmatpush1.msra.mxu0 0.0
        %326 = vmatprep.subr.mxu0 0.0
        %327 = vmatpush1.msra.mxu0 0.0
        %328 = vmatprep.subr.mxu0 0.0
        %329 = vmatpush1.msra.mxu0 0.0
        %330 = vmatprep.subr.mxu0 0.0
        %331 = vmatpush1.msra.mxu0 0.0
        %332 = vmatprep.subr.mxu0 0.0
        %333 = vmatpush1.msra.mxu0 0.0
        %334 = vmatprep.subr.mxu0 0.0
        %335 = vmatpush1.msra.mxu0 0.0
        %336 = vmatprep.subr.mxu0 0.0
        %337 = vmatpush1.msra.mxu0 0.0
        %338 = vmatprep.subr.mxu0 0.0
        %339 = vmatpush1.msra.mxu0 0.0
        %340 = vmatprep.subr.mxu0 0.0
        %341 = vmatpush1.msra.mxu0 0.0
        %342 = vmatprep.subr.mxu0 0.0
        %343 = vmatpush1.msra.mxu0 0.0
        %344 = vmatprep.subr.mxu0 0.0
        %345 = vmatpush1.msra.mxu0 0.0
        %346 = vmatprep.subr.mxu0 0.0
        %347 = vmatpush1.msra.mxu0 0.0
        %348 = vmatprep.subr.mxu0 0.0
        %349 = vmatpush1.msra.mxu0 0.0
        %350 = vmatprep.subr.mxu0 0.0
        %351 = vmatpush1.msra.mxu0 0.0
        %352 = vmatprep.subr.mxu0 0.0
        %353 = vmatpush1.msra.mxu0 0.0
        %354 = vmatprep.subr.mxu0 0.0
        %355 = vmatpush1.msra.mxu0 0.0
        %356 = vmatprep.subr.mxu0 0.0
        %357 = vmatpush1.msra.mxu0 0.0
        %358 = vmatprep.subr.mxu0 0.0
        %359 = vmatpush1.msra.mxu0 0.0
        %360 = vmatprep.mubr.f32.mxu0 0.0
        %361 = vmatmul.mubr.f32.gmra.mrb[0].mxu0 %v287
        %v362 = vpop.f32.mrb[0].mxu0
        %v363 = vadd.f32 0.0, %v362
        %v364 = vpop.f32.mrb[0].mxu0
        %365 = vmatprep.mubr.f32.mxu0 0.0
        %366 = vmatmul.mubr.f32.gmra.mrb[0].mxu0 %v290
        %v367 = vpop.f32.mrb[0].mxu0
        %v368 = vadd.f32 0.0, %v367
        %v369 = vpop.f32.mrb[0].mxu0
        %370 = vdwg.mxu0
        %v372 = vsel %vm285, %v268, 0
        %v375 = vsel %vm285, %v269, 0
        %v378 = vsel %vm292, %v267, 0
        %380 = vmatprep.subr.mxu0 0.0
        %381 = vmatpush1.msra.mxu0 %v378
        %382 = vmatprep.subr.mxu0 0.0
        %383 = vmatpush1.msra.mxu0 0.0
        %384 = vmatprep.subr.mxu0 0.0
        %385 = vmatpush1.msra.mxu0 0.0
        %386 = vmatprep.subr.mxu0 0.0
        %387 = vmatpush1.msra.mxu0 0.0
        %388 = vmatprep.subr.mxu0 0.0
        %389 = vmatpush1.msra.mxu0 0.0
        %390 = vmatprep.subr.mxu0 0.0
        %391 = vmatpush1.msra.mxu0 0.0
        %392 = vmatprep.subr.mxu0 0.0
        %393 = vmatpush1.msra.mxu0 0.0
        %394 = vmatprep.subr.mxu0 0.0
        %395 = vmatpush1.msra.mxu0 0.0
        %396 = vmatprep.subr.mxu0 0.0
        %397 = vmatpush1.msra.mxu0 0.0
        %398 = vmatprep.subr.mxu0 0.0
        %399 = vmatpush1.msra.mxu0 0.0
        %400 = vmatprep.subr.mxu0 0.0
        %401 = vmatpush1.msra.mxu0 0.0
        %402 = vmatprep.subr.mxu0 0.0
        %403 = vmatpush1.msra.mxu0 0.0
        %404 = vmatprep.subr.mxu0 0.0
        %405 = vmatpush1.msra.mxu0 0.0
        %406 = vmatprep.subr.mxu0 0.0
        %407 = vmatpush1.msra.mxu0 0.0
        %408 = vmatprep.subr.mxu0 0.0
        %409 = vmatpush1.msra.mxu0 0.0
        %410 = vmatprep.subr.mxu0 0.0
        %411 = vmatpush1.msra.mxu0 0.0
        %412 = vmatprep.subr.mxu0 0.0
        %413 = vmatpush1.msra.mxu0 0.0
        %414 = vmatprep.subr.mxu0 0.0
        %415 = vmatpush1.msra.mxu0 0.0
        %416 = vmatprep.subr.mxu0 0.0
        %417 = vmatpush1.msra.mxu0 0.0
        %418 = vmatprep.subr.mxu0 0.0
        %419 = vmatpush1.msra.mxu0 0.0
        %420 = vmatprep.subr.mxu0 0.0
        %421 = vmatpush1.msra.mxu0 0.0
        %422 = vmatprep.subr.mxu0 0.0
        %423 = vmatpush1.msra.mxu0 0.0
        %424 = vmatprep.subr.mxu0 0.0
        %425 = vmatpush1.msra.mxu0 0.0
        %426 = vmatprep.subr.mxu0 0.0
        %427 = vmatpush1.msra.mxu0 0.0
        %428 = vmatprep.subr.mxu0 0.0
        %429 = vmatpush1.msra.mxu0 0.0
        %430 = vmatprep.subr.mxu0 0.0
        %431 = vmatpush1.msra.mxu0 0.0
        %432 = vmatprep.subr.mxu0 0.0
        %433 = vmatpush1.msra.mxu0 0.0
        %434 = vmatprep.subr.mxu0 0.0
        %435 = vmatpush1.msra.mxu0 0.0
        %436 = vmatprep.subr.mxu0 0.0
        %437 = vmatpush1.msra.mxu0 0.0
        %438 = vmatprep.subr.mxu0 0.0
        %439 = vmatpush1.msra.mxu0 0.0
        %440 = vmatprep.subr.mxu0 0.0
        %441 = vmatpush1.msra.mxu0 0.0
        %442 = vmatprep.subr.mxu0 0.0
        %443 = vmatpush1.msra.mxu0 0.0
        %444 = vmatprep.mubr.f32.mxu0 0.0
        %445 = vmatmul.mubr.f32.gmra.mrb[0].mxu0 %v372
        %v446 = vpop.f32.mrb[0].mxu0
        %v447 = vadd.f32 %v363, %v446
        %v448 = vpop.f32.mrb[0].mxu0
        %449 = vmatprep.mubr.f32.mxu0 0.0
        %450 = vmatmul.mubr.f32.gmra.mrb[0].mxu0 %v375
        %v451 = vpop.f32.mrb[0].mxu0
        %v452 = vadd.f32 %v368, %v451
        %v453 = vpop.f32.mrb[0].mxu0
        %454 = vdwg.mxu0
        %v455 = vld [vmem:[%s3] sm:$0xff]
        %v456 = vld [vmem:[%s3 + $0x8] sm:$0xff]
        %v457 = vld [vmem:[%s3 + $0x10] sm:$0xff]
        %v458 = vld [vmem:[%s3 + $0x18] sm:$0xff]
        %460 = vset.pattern.permute.xlu0 0
        %461 = vperm.xlu0 %460, %v455
        %v462 = vpop.permute.xlu0 %461
        %465 = vset.pattern.permute.xlu0 0
        %466 = vperm.xlu0 %465, %v456
        %v467 = vpop.permute.xlu0 %466
        %v469 = vmul.f32 %v447, %v462
        %v470 = vmul.f32 %v452, %v467
        %472 = vset.pattern.permute.xlu0 0
        %473 = vperm.xlu0 %472, %v457
        %v474 = vpop.permute.xlu0 %473
        %477 = vset.pattern.permute.xlu0 0
        %478 = vperm.xlu0 %477, %v458
        %v479 = vpop.permute.xlu0 %478
        %v481 = vadd.f32 %v469, %v474
        %v482 = vadd.f32 %v470, %v479
        %v483 = vsub.f32 0.0, %v482
        %v484 = vmul.f32 %v483, 1.442695
        %v485 = vpow.pop %v484
        %v486 = vadd.f32 %v485, 1.0
        %v487 = vrcp.pop %v486
        %v488 = vmul.f32 %v481, %v487
        %vm489 = vcmask 121856
        %490 = vst.msk [vmem:[%s246] sm:$0xff] %vm489, %v488
        %s491 = sand.u32 %s144, 1
        %s492 = scalar_lea.sflag [#allocation3], %s491
        %s493 = sand.u32 %s144, 1
        %s494 = smul.addr %s493, 8
        %s495 = scalar_lea.vmem [#allocation2], %s494
        // Predicated region
        $region37: #{mgcn_forward.1} parent=35 // pred_check
          %p496 = pneg %p154
        $region38: #{mgcn_forward.1} parent=35 // pred_check_branch
          %498 = sbr.rel (%p496) target = $region40
        $region39: #{mgcn_forward.1} parent=35 // pred_region
          %s500 = ssub.s32 128, 128
          %501 = vsyncadd %s492, %s500
          %s502 = sadd.s32 %s23, %s22
          %s503 = smul.addr %s502, 128
          %s504 = scalar_lea.hbm %s4, %s503
          %s506 = sshll.u32 %s495, 4
          %s507 = int_to_ptr.vmem [resolvable:$true] %s506
          %509 = dma.vmem_to_hbm [thread:$0]  %s507, 128, %s504, %s492
        $region40: #{mgcn_forward.1} parent=35 // pred_fallthru
          _
      $region36: #{mgcn_forward.1} parent=5 // pred_fallthru
        _
      %p510 = scmp.le.s32.totalorder 2, %s13
      // Predicated region
      $region41: #{mgcn_forward.1} parent=5 // pred_check
        %p511 = pneg %p510
      $region42: #{mgcn_forward.1} parent=5 // pred_check_branch
        %513 = sbr.rel (%p511) target = $region44
      $region43: #{mgcn_forward.1} parent=5 // pred_region
        %s514 = ssub.s32 %s13, 2
        // Predicated region
        $region45: #{mgcn_forward.1} parent=43 // pred_check
          %p515 = pneg %p160
        $region46: #{mgcn_forward.1} parent=43 // pred_check_branch
          %517 = sbr.rel (%p515) target = $region48
        $region47: #{mgcn_forward.1} parent=43 // pred_region
          %s518 = sand.u32 %s145, 1
          %s519 = scalar_lea.sflag [#allocation3], %s518
          %s520 = sand.u32 %s145, 1
          %s521 = smul.addr %s520, 8
          %s522 = scalar_lea.vmem [#allocation2], %s521
          %523 = dma.done %s519, 128
        $region48: #{mgcn_forward.1} parent=43 // pred_fallthru
          _
      $region44: #{mgcn_forward.1} parent=5 // pred_fallthru
        _
    $region6: #{mgcn_forward.1} parent=1 // loop_footer
      %s17 = sadd.s32 1, %s13
    $region7: #{mgcn_forward.1} parent=1 // loop_footer_branch
      %12 = sbr.rel target = $region3
    $region8: #{mgcn_forward.1} parent=1 // loop_exit
      _
    %524 = vsyncpa [#allocation3], 1
    %s525 = scalar_lea.sflag [#allocation3], 1
    %526 = vsyncpa %s525, 1

</llo_original>
